<compile_context>
chip_gen: v5e
topology: v5e:2x2
jax: 0.10.0
libtpu: 0.0.40
codegen_flags: <defaults>
</compile_context>

<pallas_src>
import functools

import jax
import jax.numpy as jnp
from jax.experimental import pallas as pl
from jax.experimental.pallas import tpu as pltpu


def _choose_images_per_step(batch, tokens, row_target=512):
    """Images per grid step: a divisor of `batch`, rows/step <= row_target,
    and >= 2 grid steps whenever batch >= 2 (v7x has 2 TensorCores)."""
    best = 1
    for g in range(1, batch + 1):
        if batch % g != 0:
            continue
        if g * tokens > row_target:
            break
        if batch >= 2 and (batch // g) < 2:
            continue
        best = g
    return best


def _patch_embed_kernel(x_ref, w_ref, bias_ref, o_ref, *, imgs_per_step):
    # x_ref:    (G, T, K) bf16  per-image flattened patches; row 0 is zeros
    #                            (the cls-token slot).
    # w_ref:    (K, D)    bf16  projection weight; constant index_map -> DMA'd
    #                            once, VMEM-resident.
    # bias_ref: (T, D)    f32   row 0: cls_token + pos_emb[0];
    #                            rows 1..: conv_bias + pos_emb[1:]. Resident.
    # o_ref:    (G, T, D) out dtype.
    w = w_ref[...]
    bias = bias_ref[...]
    for g in range(imgs_per_step):           # static unroll, G is small
        acc = jnp.dot(x_ref[g], w, preferred_element_type=jnp.float32)
        o_ref[g] = (acc + bias).astype(o_ref.dtype)


def patch_embedding_forward(x_nchw, conv_w, conv_b, cls_token, pos_emb,
                            patch_size, out_dtype=None):
    """Forward pass matching PatchEmbedding.forward
    (use_cls_token=True, learned positional embedding, dropout=0).

    x_nchw:    (B, C, H, W)
    conv_w:    (D, C, P, P)   PyTorch Conv2d weight layout
    conv_b:    (D,)
    cls_token: (1, 1, D)
    pos_emb:   (1, num_tokens, D)   num_tokens = num_patches + 1
    returns:   (B, num_tokens, D)
    """
    B, C, H, W = x_nchw.shape
    P = patch_size
    D = conv_w.shape[0]
    hp, wp = H // P, W // P
    num_patches = hp * wp
    num_tokens = num_patches + 1
    K = C * P * P
    out_dtype = x_nchw.dtype if out_dtype is None else out_dtype

    # --- im2col: NCHW -> (B, num_tokens, K); (c, i, j) order matches Conv2d.
    # Row 0 of every image is zeros: 0 @ W + bias_row0 = cls_token + pos[0].
    patches = x_nchw.reshape(B, C, hp, P, wp, P)
    patches = jnp.transpose(patches, (0, 2, 4, 1, 3, 5))   # (B, hp, wp, C, P, P)
    patches = patches.reshape(B, num_patches, K).astype(jnp.bfloat16)
    patches = jnp.pad(patches, ((0, 0), (1, 0), (0, 0)))   # (B, num_tokens, K)

    w_mat = conv_w.reshape(D, K).T.astype(jnp.bfloat16)    # (K, D)

    # f32 epilogue tile: cls+pos for token 0, conv_bias+pos for patch tokens.
    cls_row = (cls_token[0, 0] + pos_emb[0, 0])[None, :]           # (1, D)
    patch_rows = pos_emb[0, 1:, :] + conv_b[None, :]               # (num_patches, D)
    bias_tile = jnp.concatenate([cls_row, patch_rows], 0).astype(jnp.float32)

    G = _choose_images_per_step(B, num_tokens)
    grid = (B // G,)

    out_bytes = jnp.dtype(out_dtype).itemsize
    need = (2 * G * num_tokens * K * 2               # double-buffered patch tiles
            + 2 * G * num_tokens * D * out_bytes     # double-buffered output tiles
            + 2 * K * D * 2                          # resident weight
            + 2 * num_tokens * D * 4)                # resident bias tile
    vmem_limit = int(min(max(2 * need, 32 * 1024 * 1024), 48 * 1024 * 1024))

    out = pl.pallas_call(
        functools.partial(_patch_embed_kernel, imgs_per_step=G),
        out_shape=jax.ShapeDtypeStruct((B, num_tokens, D), out_dtype),
        grid_spec=pltpu.PrefetchScalarGridSpec(
            num_scalar_prefetch=0,
            grid=grid,
            in_specs=[
                pl.BlockSpec((G, num_tokens, K), lambda i: (i, 0, 0)),   # streamed
                pl.BlockSpec((K, D), lambda i: (0, 0)),                  # resident W
                pl.BlockSpec((num_tokens, D), lambda i: (0, 0)),         # resident bias
            ],
            out_specs=pl.BlockSpec((G, num_tokens, D), lambda i: (i, 0, 0)),
        ),
        compiler_params=pltpu.CompilerParams(
            dimension_semantics=("parallel",),
            vmem_limit_bytes=vmem_limit,
            allow_input_fusion=[True, False, False],
        ),
    )(patches, w_mat, bias_tile)

    # TODO(synk): dropout with p=0.0 is the identity; no kernel needed.
    return out


if __name__ == "__main__":
    # Small config consistent with the module: image 16x16, patch 4, 4 channels,
    # embed_dim 32, batch 2, use_cls_token=True, learned positional embedding.
    B, C, H, W = 2, 4, 16, 16
    P = 4
    D = 32
    num_patches = (H // P) * (W // P)     # 16
    num_tokens = num_patches + 1          # 17

    key = jax.random.PRNGKey(0)
    kx, kw, kb, kc, kp = jax.random.split(key, 5)

    x = jax.random.normal(kx, (B, C, H, W), dtype=jnp.float32)
    conv_w = 0.02 * jax.random.normal(kw, (D, C, P, P), dtype=jnp.float32)
    conv_b = 0.02 * jax.random.normal(kb, (D,), dtype=jnp.float32)
    cls_token = 0.02 * jax.random.normal(kc, (1, 1, D), dtype=jnp.float32)
    pos_emb = 0.02 * jax.random.normal(kp, (1, num_tokens, D), dtype=jnp.float32)

    fwd = jax.jit(patch_embedding_forward, static_argnames="patch_size")
    out = jax.block_until_ready(
        fwd(x, conv_w, conv_b, cls_token, pos_emb, patch_size=P))
    assert out.shape == (B, num_tokens, D), out.shape

    # Pure-JAX f32 reference (conv-as-matmul). The kernel feeds bf16 into the
    # MXU, so compare with a tolerance covering bf16 input rounding.
    patches_ref = x.reshape(B, C, H // P, P, W // P, P)
    patches_ref = jnp.transpose(patches_ref, (0, 2, 4, 1, 3, 5)).reshape(
        B, num_patches, C * P * P)
    proj_ref = jnp.einsum("bpk,kd->bpd", patches_ref,
                          conv_w.reshape(D, C * P * P).T) + conv_b[None, None, :]
    cls_ref = jnp.broadcast_to(cls_token, (B, 1, D))
    ref = jnp.concatenate([cls_ref, proj_ref], axis=1) + pos_emb
    max_err = float(jnp.max(jnp.abs(out - ref)))
    assert jnp.allclose(out, ref, atol=3e-2, rtol=3e-2), max_err

    print("KERNEL_OK")
</pallas_src>

<mosaic_0001>
module attributes {stable_mosaic.version = 11 : i64} {
  func.func @_patch_embed_kernel(%arg0: i32, %arg1: memref<1x17x64xbf16, #tpu.memory_space<vmem>>, %arg2: memref<64x32xbf16, #tpu.memory_space<vmem>>, %arg3: memref<17x32xf32, #tpu.memory_space<vmem>>, %arg4: memref<1x17x32xf32, #tpu.memory_space<vmem>>) attributes {dimension_semantics = [#tpu.dimension_semantics<parallel>], iteration_bounds = array<i64: 2>, scalar_prefetch = 0 : i64, scratch_operands = 0 : i64, tpu.core_type = #tpu.core_type<tc>, window_params = [{transform_indices = @transform_0, window_bounds = array<i64: 1, 17, 64>}, {pipeline_mode = #tpu.pipeline_mode<synchronous>, transform_indices = @transform_1, window_bounds = array<i64: 64, 32>}, {pipeline_mode = #tpu.pipeline_mode<synchronous>, transform_indices = @transform_2, window_bounds = array<i64: 17, 32>}, {transform_indices = @transform_3, window_bounds = array<i64: 1, 17, 32>}]} {
    %c0 = arith.constant 0 : index
    %c0_0 = arith.constant 0 : index
    %0 = vector.load %arg2[%c0, %c0_0] : memref<64x32xbf16, #tpu.memory_space<vmem>>, vector<64x32xbf16>
    %c0_1 = arith.constant 0 : index
    %c0_2 = arith.constant 0 : index
    %1 = vector.load %arg3[%c0_1, %c0_2] : memref<17x32xf32, #tpu.memory_space<vmem>>, vector<17x32xf32>
    %c0_3 = arith.constant 0 : index
    %c0_4 = arith.constant 0 : index
    %c0_5 = arith.constant 0 : index
    %2 = vector.load %arg1[%c0_3, %c0_4, %c0_5] : memref<1x17x64xbf16, #tpu.memory_space<vmem>>, vector<1x17x64xbf16>
    %3 = vector.shape_cast %2 : vector<1x17x64xbf16> to vector<17x64xbf16>
    %cst = arith.constant dense<0.000000e+00> : vector<17x32xf32>
    %4 = tpu.matmul %3, %0, %cst {dimension_numbers = #tpu.dot_dimension_numbers<[1], [0], [0], [1], [0, 0, 1, 1], [], []>} : vector<17x64xbf16>, vector<64x32xbf16>, vector<17x32xf32> -> vector<17x32xf32>
    %5 = arith.addf %4, %1 : vector<17x32xf32>
    %c0_6 = arith.constant 0 : index
    %c0_7 = arith.constant 0 : index
    %c0_8 = arith.constant 0 : index
    %6 = vector.load %arg4[%c0_6, %c0_7, %c0_8] : memref<1x17x32xf32, #tpu.memory_space<vmem>>, vector<1x17x32xf32>
    %7 = vector.shape_cast %6 : vector<1x17x32xf32> to vector<17x32xf32>
    %8 = vector.shape_cast %5 : vector<17x32xf32> to vector<1x17x32xf32>
    tpu.vector_store %arg4[%c0_6, %c0_7, %c0_8], %8 {strides = array<i32>} : memref<1x17x32xf32, #tpu.memory_space<vmem>>, vector<1x17x32xf32>,
    return
  }
  func.func @transform_0(%arg0: i32) -> (i32, i32, i32) {
    %c0_i32 = arith.constant 0 : i32
    %c0_i32_0 = arith.constant 0 : i32
    %c0_i32_1 = arith.constant 0 : i32
    return %arg0, %c0_i32, %c0_i32_0 : i32, i32, i32
  }
  func.func @transform_1(%arg0: i32) -> (i32, i32) {
    %c0_i32 = arith.constant 0 : i32
    %c0_i32_0 = arith.constant 0 : i32
    %c0_i32_1 = arith.constant 0 : i32
    return %c0_i32, %c0_i32_0 : i32, i32
  }
  func.func @transform_2(%arg0: i32) -> (i32, i32) {
    %c0_i32 = arith.constant 0 : i32
    %c0_i32_0 = arith.constant 0 : i32
    %c0_i32_1 = arith.constant 0 : i32
    return %c0_i32, %c0_i32_0 : i32, i32
  }
  func.func @transform_3(%arg0: i32) -> (i32, i32, i32) {
    %c0_i32 = arith.constant 0 : i32
    %c0_i32_0 = arith.constant 0 : i32
    %c0_i32_1 = arith.constant 0 : i32
    return %arg0, %c0_i32, %c0_i32_0 : i32, i32, i32
  }
}

</mosaic_0001>

<llo_original>
// kernel: patch_embedding_forward.2
$region0: #{patch_embedding_forward.2}
  #allocation0 [shape = 'u32[]', space=smem, size = 0x4, offset = 0x4, fixed_abs, tag = 'smem constant byte address 0x4 - core index']
  #allocation1 [shape = 'u32[72,128]{1,0:T(1,128)}', space=vmem, size = 0x9000, scoped, tag = 'internal scratch']
  #allocation2 [shape = 'u32[2048]{0}', space=vmem, size = 0x2000, scoped, tag = 'scoped memory for patch_embedding_forward.2']
  #allocation3 [shape = 'u32[2048]{0}', space=vmem, size = 0x2000, scoped, tag = 'scoped memory for patch_embedding_forward.2']
  #allocation4 [shape = 'u32[2048]{0}', space=vmem, size = 0x2000, scoped, tag = 'scoped memory for patch_embedding_forward.2']
  #allocation5 [shape = 'u32[2048]{0}', space=vmem, size = 0x2000, scoped, tag = 'scoped memory for patch_embedding_forward.2']
  #allocation6 [shape = 'u32[2048]{0}', space=vmem, size = 0x2000, scoped, tag = 'scoped memory for patch_embedding_forward.2']
  %s0 = inlined_call_operand.vmem [shape: bf16[64,32], index: 0, kind: input, shape index: {}]
  %s1 = inlined_call_operand.vmem [shape: f32[17,32], index: 1, kind: input, shape index: {}]
  %s2 = inlined_call_operand.vmem [shape: bf16[2,16,64], index: 2, kind: input, shape index: {}]
  %s3 = inlined_call_operand.<no memory space> [shape: bf16[], index: 3, kind: input, shape index: {}]
  %s4 = inlined_call_operand.vmem [shape: f32[2,17,32], index: 4, kind: output, shape index: {}]
  %s5 = sld [smem:[#allocation0]]
  $region45: #{patch_embedding_forward.2} parent=0
    _
  %s7 = ssub.s32 1, %s5
  %s8 = scalar_select 0, %s7, %s5
  %v9 = vstv %s3
  %v10 = vunpack.i.l.bf16 %v9
  %v12 = vunpack.i.h.bf16 %v9
  loop: start=0, step=1, limit=4
  $region2: #{patch_embedding_forward.2} parent=0 // loop_pre_header
    _
  $region3: #{patch_embedding_forward.2} parent=0 // loop_header
    %s15 = sphi 0, %s19
    %p16 = scmp.ge.s32.totalorder %s15, 4
    %s25 = sphi 0, %s27
    %s28 = sphi 0, %s25
    %s29 = sphi 0, %s28
    %s45 = sphi 0, %s29
    %s49 = sphi 0, %s49
    %s51 = sphi 0, %s49
    %s52 = sphi 0, %s51
    %s66 = sphi 0, %s52
    %s70 = sphi 0, %s70
    %s72 = sphi 0, %s70
    %s73 = sphi 0, %s72
    %s87 = sphi 0, %s73
    %s93 = sphi 0, %s95
    %s96 = sphi 0, %s93
    %s97 = sphi 0, %s96
    %s113 = sphi 0, %s97
  $region4: #{patch_embedding_forward.2} parent=0 // loop_header_branch
    %18 = sbr.rel (%p16) target = $region8
  $region5: #{patch_embedding_forward.2} parent=0 // loop_body
    %s20 = ssub.s32 %s15, 1
    %s21 = ssub.s32 %s15, 2
    %s22 = sadd.s32 %s15, 1
    %s23 = ssub.s32 %s15, %s22
    %p24 = scmp.eq.s32.totalorder %s23, 0
    %s26 = sadd.s32 %s25, 1
    %s27 = scalar_select %p24, %s25, %s26
    %p30 = pneg %p24
    %p31 = scmp.eq.s32.totalorder %s15, 1
    %p32 = por %p30, %p31
    %p33 = scmp.ne.s32.totalorder %s25, %s28
    %p34 = scmp.eq.s32.totalorder %s15, 0
    %p35 = por %p33, %p34
    %p36 = scmp.ne.s32.totalorder %s25, %s28
    %p37 = scmp.eq.s32.totalorder %s20, 1
    %p38 = por %p36, %p37
    %p39 = scmp.ne.s32.totalorder %s28, %s29
    %p40 = scmp.eq.s32.totalorder %s20, 0
    %p41 = por %p39, %p40
    %p42 = scmp.ne.s32.totalorder %s28, %s29
    %p43 = scmp.eq.s32.totalorder %s21, 1
    %p44 = por %p42, %p43
    %p46 = scmp.ne.s32.totalorder %s29, %s45
    %p47 = scmp.eq.s32.totalorder %s21, 0
    %p48 = por %p46, %p47
    %s50 = sadd.s32 %s49, 1
    %p53 = scmp.eq.s32.totalorder %s15, 1
    %p54 = scmp.ne.s32.totalorder %s49, %s51
    %p55 = scmp.eq.s32.totalorder %s15, 0
    %p56 = por %p54, %p55
    %p57 = scmp.ne.s32.totalorder %s49, %s51
    %p58 = scmp.eq.s32.totalorder %s20, 1
    %p59 = por %p57, %p58
    %p60 = scmp.ne.s32.totalorder %s51, %s52
    %p61 = scmp.eq.s32.totalorder %s20, 0
    %p62 = por %p60, %p61
    %p63 = scmp.ne.s32.totalorder %s51, %s52
    %p64 = scmp.eq.s32.totalorder %s21, 1
    %p65 = por %p63, %p64
    %p67 = scmp.ne.s32.totalorder %s52, %s66
    %p68 = scmp.eq.s32.totalorder %s21, 0
    %p69 = por %p67, %p68
    %s71 = sadd.s32 %s70, 1
    %p74 = scmp.eq.s32.totalorder %s15, 1
    %p75 = scmp.ne.s32.totalorder %s70, %s72
    %p76 = scmp.eq.s32.totalorder %s15, 0
    %p77 = por %p75, %p76
    %p78 = scmp.ne.s32.totalorder %s70, %s72
    %p79 = scmp.eq.s32.totalorder %s20, 1
    %p80 = por %p78, %p79
    %p81 = scmp.ne.s32.totalorder %s72, %s73
    %p82 = scmp.eq.s32.totalorder %s20, 0
    %p83 = por %p81, %p82
    %p84 = scmp.ne.s32.totalorder %s72, %s73
    %p85 = scmp.eq.s32.totalorder %s21, 1
    %p86 = por %p84, %p85
    %p88 = scmp.ne.s32.totalorder %s73, %s87
    %p89 = scmp.eq.s32.totalorder %s21, 0
    %p90 = por %p88, %p89
    %s91 = ssub.s32 %s15, %s22
    %p92 = scmp.eq.s32.totalorder %s91, 0
    %s94 = sadd.s32 %s93, 1
    %s95 = scalar_select %p92, %s93, %s94
    %p98 = pneg %p92
    %p99 = scmp.eq.s32.totalorder %s15, 1
    %p100 = por %p98, %p99
    %p101 = scmp.ne.s32.totalorder %s93, %s96
    %p102 = scmp.eq.s32.totalorder %s15, 0
    %p103 = por %p101, %p102
    %p104 = scmp.ne.s32.totalorder %s93, %s96
    %p105 = scmp.eq.s32.totalorder %s20, 1
    %p106 = por %p104, %p105
    %p107 = scmp.ne.s32.totalorder %s96, %s97
    %p108 = scmp.eq.s32.totalorder %s20, 0
    %p109 = por %p107, %p108
    %p110 = scmp.ne.s32.totalorder %s96, %s97
    %p111 = scmp.eq.s32.totalorder %s21, 1
    %p112 = por %p110, %p111
    %p114 = scmp.ne.s32.totalorder %s97, %s113
    %p115 = scmp.eq.s32.totalorder %s21, 0
    %p116 = por %p114, %p115
    %p117 = scmp.le.s32.totalorder 1, %s15
    %p118 = scmp.lt.s32.totalorder %s15, 3
    %p119 = pnand %p117, %p118
    %p120 = pneg %p119
    // Predicated region
    $region9: #{patch_embedding_forward.2} parent=5 // pred_check
      _
    $region10: #{patch_embedding_forward.2} parent=5 // pred_check_branch
      %122 = sbr.rel (%p119) target = $region12
    $region11: #{patch_embedding_forward.2} parent=5 // pred_region
      %s123 = ssub.s32 %s15, 1
      // Predicated region
      $region13: #{patch_embedding_forward.2} parent=11 // pred_check
        %p124 = pneg %p62
      $region14: #{patch_embedding_forward.2} parent=11 // pred_check_branch
        %126 = sbr.rel (%p124) target = $region16
      $region15: #{patch_embedding_forward.2} parent=11 // pred_region
        _
      $region16: #{patch_embedding_forward.2} parent=11 // pred_fallthru
        _
      // Predicated region
      $region17: #{patch_embedding_forward.2} parent=11 // pred_check
        %p127 = pneg %p83
      $region18: #{patch_embedding_forward.2} parent=11 // pred_check_branch
        %129 = sbr.rel (%p127) target = $region20
      $region19: #{patch_embedding_forward.2} parent=11 // pred_region
        _
      $region20: #{patch_embedding_forward.2} parent=11 // pred_fallthru
        _
    $region12: #{patch_embedding_forward.2} parent=5 // pred_fallthru
      _
    %p130 = scmp.lt.s32.totalorder %s15, 2
    // Predicated region
    $region21: #{patch_embedding_forward.2} parent=5 // pred_check
      %p131 = pneg %p130
    $region22: #{patch_embedding_forward.2} parent=5 // pred_check_branch
      %133 = sbr.rel (%p131) target = $region24
    $region23: #{patch_embedding_forward.2} parent=5 // pred_region
      // Predicated region
      $region25: #{patch_embedding_forward.2} parent=23 // pred_check
        %p134 = pneg %p35
      $region26: #{patch_embedding_forward.2} parent=23 // pred_check_branch
        %136 = sbr.rel (%p134) target = $region28
      $region27: #{patch_embedding_forward.2} parent=23 // pred_region
        %p137 = scmp.lt.s32.totalorder %s15, 1
        %s138 = scalar_select %p137, %s15, 1
        %s139 = smul.addr %s138, 2
        %s140 = sadd.s32 4294967295, %s139
        %s141 = smul.addr %s140, 4
        %s142 = scalar_lea.vmem %s2, %s141
      $region28: #{patch_embedding_forward.2} parent=23 // pred_fallthru
        _
    $region24: #{patch_embedding_forward.2} parent=5 // pred_fallthru
      _
    %p143 = scmp.le.s32.totalorder 1, %s15
    %p144 = scmp.lt.s32.totalorder %s15, 3
    %p145 = pnand %p143, %p144
    %p146 = pneg %p145
    // Predicated region
    $region29: #{patch_embedding_forward.2} parent=5 // pred_check
      _
    $region30: #{patch_embedding_forward.2} parent=5 // pred_check_branch
      %148 = sbr.rel (%p145) target = $region32
    $region31: #{patch_embedding_forward.2} parent=5 // pred_region
      #allocation7 [shape = 'u8[6144]{0}', space=vmem, size = 0x1800, dematerialized = true, scoped, tag = 'FusionAdapter Buffer %fusion.1 = bf16[2,17,64]{2,1,0:T(8,128)(2,1)} fusion(%param_2.3, %param_3), kind=kLoop, calls=%fused_computation.3.clone, metadata={op_name="jit(patch_embedding_forward)/jit(_pad)/pad" stack_frame_id=10}']
      %s149 = ssub.s32 %s15, 1
      %p150 = scmp.lt.s32.totalorder %s20, 1
      %s151 = scalar_select %p150, %s20, 1
      %s152 = smul.addr %s151, 2
      %s153 = sadd.s32 4294967295, %s152
      %s154 = smul.addr %s153, 4
      %s155 = scalar_lea.vmem %s2, %s154
      %p156 = pneg %p41
      %p157 = pneg %p38
      %p158 = pneg %p62
      %p159 = pneg %p59
      %p160 = pneg %p83
      %p161 = pneg %p80
      %p162 = pneg %p109
      %p163 = pneg %p106
      %p164 = scmp.lt.s32.totalorder %s20, 1
      %s165 = scalar_select %p164, %s20, 1
      %s166 = smul.addr %s165, 3
      %s167 = smul.addr %s166, 8
      %s168 = scalar_lea.vmem %s4, %s167
      %p169 = scmp.lt.s32.totalorder %s20, 1
      %s170 = scalar_select %p169, %s20, 1
      %s171 = smul.addr %s170, 2
      %s172 = sadd.s32 4294967295, %s171
      %s173 = smul.addr %s172, 4
      %s174 = scalar_lea.vmem %s2, %s173
      %p175 = scmp.lt.s32.totalorder %s20, 1
      %s176 = scalar_select %p175, %s20, 1
      %s177 = smul.addr %s176, 3
      %s178 = smul.addr %s177, 8
      %s179 = scalar_lea.vmem %s4, %s178
      %s181 = sand.u32 0, 85
      %s182 = sshrl.u32 %s181, 1
      %s183 = sor.u32 %s181, %s182
      %s184 = sand.u32 51, %s183
      %s185 = sshrl.u32 %s184, 2
      %s186 = sor.u32 %s184, %s185
      %s187 = sand.u32 15, %s186
      %v188 = vld [vmem:[%s174] sm:%s187]
      %v189 = vunpack.c.l.bf16 %v188
      %v190 = vunpack.c.h.bf16 %v188
      %s191 = scalar_lea.vmem %s174, 4
      %v192 = vld [vmem:[%s191] sm:$0xf]
      %v193 = vunpack.c.l.bf16 %v192
      %v194 = vunpack.c.h.bf16 %v192
      %v195 = vlaneseq
      %v196 = vand.u32 %v195, 127
      %vm198 = vcmp.lt.s32.totalorder %v196, 64
      %v199 = vsel %vm198, %v193, %v10
      %vm200 = vcmask 1046528
      %v201 = vsel %vm200, %v199, %v10
      %v202 = vrot.slane %v201, 7
      %v203 = vpack.c.bf16 0.0, %v202
      %s205 = ssub.s32 16, 1
      %206 = vst [vmem:[#allocation7] sm:%s205] %v203
      %s207 = scalar_lea.vmem %s174, 8
      %v208 = vld [vmem:[%s207] sm:$0xf]
      %v209 = vunpack.c.l.bf16 %v208
      %v210 = vunpack.c.h.bf16 %v208
      %v211 = vlaneseq
      %v212 = vand.u32 %v211, 127
      %vm214 = vcmp.lt.s32.totalorder %v212, 64
      %v215 = vsel %vm214, %v209, %v10
      %vm216 = vcmask 1046528
      %v217 = vsel %vm216, %v215, %v199
      %v218 = vrot.slane %v217, 7
      %s219 = scalar_lea.vmem [#allocation7], 4
      %v220 = vpack.c.bf16 0.0, %v218
      %s222 = ssub.s32 16, 1
      %223 = vst [vmem:[%s219] sm:%s222] %v220
      %vm224 = vcmask 1046528
      %v225 = vsel %vm224, %v10, %v215
      %v226 = vrot.slane %v225, 7
      %s227 = scalar_lea.vmem [#allocation7], 8
      %v228 = vpack.c.bf16 0.0, %v226
      %s230 = ssub.s32 16, 1
      %231 = vst [vmem:[%s227] sm:%s230] %v228
      %v233 = vld [vmem:[%s0] sm:$0xf]
      %v234 = vld [vmem:[%s0 + $0x4] sm:$0xf]
      %v235 = vld [vmem:[%s0 + $0x8] sm:$0xf]
      %v236 = vld [vmem:[%s0 + $0xc] sm:$0xf]
      %v237 = vld [vmem:[%s0 + $0x10] sm:$0xf]
      %v238 = vld [vmem:[%s0 + $0x14] sm:$0xf]
      %v239 = vld [vmem:[%s0 + $0x18] sm:$0xf]
      %v240 = vld [vmem:[%s0 + $0x1c] sm:$0xf]
      %v241 = vld [vmem:[%s1] sm:$0xff]
      %v242 = vld [vmem:[%s1 + $0x8] sm:$0xff]
      %v243 = vld [vmem:[%s1 + $0x10] sm:$0x1]
      %v244 = vld [vmem:[#allocation7] sm:$0xf]
      %v245 = vld [vmem:[#allocation7 + $0x4] sm:$0xf]
      %v246 = vld [vmem:[#allocation7 + $0x8] sm:$0x1]
      %v250 = vunpack.c.l.b16 %v244
      %v251 = vunpack.c.l.b16 %v245
      %v252 = vunpack.c.l.b16 %v246
      %v253 = vpack.c.b16 %v251, %v250
      %v254 = vpack.c.b16 %v252, %v252
      %v263 = vunpack.c.l.b16 %v233
      %v264 = vunpack.c.l.b16 %v234
      %v265 = vunpack.c.l.b16 %v235
      %v266 = vunpack.c.l.b16 %v236
      %v267 = vunpack.c.l.b16 %v237
      %v268 = vunpack.c.l.b16 %v238
      %v269 = vunpack.c.l.b16 %v239
      %v270 = vunpack.c.l.b16 %v240
      %v271 = vpack.c.b16 %v264, %v263
      %v272 = vpack.c.b16 %v266, %v265
      %v273 = vpack.c.b16 %v268, %v267
      %v274 = vpack.c.b16 %v270, %v269
      %vm279 = vcmask 523264
      %v281 = vsel %vm279, %v253, 0
      %v284 = vsel %vm279, %v254, 0
      %286 = vmatpush.bf16.msra.mxu0 0
      %287 = vmatpush.bf16.msra.mxu0 0
      %288 = vmatpush.bf16.msra.mxu0 0
      %289 = vmatpush.bf16.msra.mxu0 0
      %290 = vmatpush.bf16.msra.mxu0 %v274
      %291 = vmatpush.bf16.msra.mxu0 %v273
      %292 = vmatpush.bf16.msra.mxu0 %v272
      %293 = vmatpush.bf16.msra.mxu0 %v271
      %294 = vmatmul.bf16.gmra.mxu0 %v281
      %v295 = vpop.f32.mrf.mxu0
      %v296 = vadd.f32 %v241, %v295
      %v297 = vpop.f32.mrf.mxu0
      %v298 = vadd.f32 %v242, %v297
      %299 = vmatmul.bf16.gmra.mxu0 %v284
      %v300 = vpop.f32.mrf.mxu0
      %v301 = vadd.f32 %v243, %v300
      %v302 = vpop.f32.mrf.mxu0
      %303 = vdwg.mxu0
      %vm304 = vcmask 261120
      %305 = vst.msk [vmem:[%s179] sm:$0xff] %vm304, %v296
      %306 = vst.msk [vmem:[%s179 + $0x8] sm:$0xff] %vm304, %v298
      %vm307 = vcmask 253952
      %308 = vst.msk [vmem:[%s179 + $0x10] sm:$0x1] %vm307, %v301
      %p309 = scmp.lt.s32.totalorder %s20, 1
      %s310 = scalar_select %p309, %s20, 1
      %s311 = smul.addr %s310, 3
      %s312 = smul.addr %s311, 8
      %s313 = scalar_lea.vmem %s4, %s312
      // Predicated region
      $region33: #{patch_embedding_forward.2} parent=31 // pred_check
        %p314 = pneg %p106
      $region34: #{patch_embedding_forward.2} parent=31 // pred_check_branch
        %316 = sbr.rel (%p314) target = $region36
      $region35: #{patch_embedding_forward.2} parent=31 // pred_region
        _
      $region36: #{patch_embedding_forward.2} parent=31 // pred_fallthru
        _
    $region32: #{patch_embedding_forward.2} parent=5 // pred_fallthru
      _
    %p317 = scmp.le.s32.totalorder 2, %s15
    // Predicated region
    $region37: #{patch_embedding_forward.2} parent=5 // pred_check
      %p318 = pneg %p317
    $region38: #{patch_embedding_forward.2} parent=5 // pred_check_branch
      %320 = sbr.rel (%p318) target = $region40
    $region39: #{patch_embedding_forward.2} parent=5 // pred_region
      %s321 = ssub.s32 %s15, 2
      // Predicated region
      $region41: #{patch_embedding_forward.2} parent=39 // pred_check
        %p322 = pneg %p112
      $region42: #{patch_embedding_forward.2} parent=39 // pred_check_branch
        %324 = sbr.rel (%p322) target = $region44
      $region43: #{patch_embedding_forward.2} parent=39 // pred_region
        %p325 = scmp.lt.s32.totalorder %s21, 1
        %s326 = scalar_select %p325, %s21, 1
        %s327 = smul.addr %s326, 3
        %s328 = smul.addr %s327, 8
        %s329 = scalar_lea.vmem %s4, %s328
      $region44: #{patch_embedding_forward.2} parent=39 // pred_fallthru
        _
    $region40: #{patch_embedding_forward.2} parent=5 // pred_fallthru
      _
  $region6: #{patch_embedding_forward.2} parent=0 // loop_footer
    %s19 = sadd.s32 1, %s15
  $region7: #{patch_embedding_forward.2} parent=0 // loop_footer_branch
    %14 = sbr.rel target = $region3
  $region8: #{patch_embedding_forward.2} parent=0 // loop_exit
    _

</llo_original>
